<compile_context>
chip_gen: v7x
topology: tpu7x:2x2x1
jax: 0.10.0
libtpu: 0.0.40
codegen_flags: <defaults>
</compile_context>

<pallas_src>
import functools
import math

import jax
import jax.numpy as jnp
from jax.experimental import pallas as pl
from jax.experimental.pallas import tpu as pltpu


# Finite large-negative mask value: exp() underflows to exactly 0 in f32 and,
# unlike -inf, can never produce NaN via inf - inf.
NEG_INF = -1.0e30


# ---------------------------------------------------------------------------
# Per-generation tile candidates & VMEM limits
# ---------------------------------------------------------------------------

def _select_tiles_and_vmem():
    try:
        kind = jax.devices()[0].device_kind.lower()
    except Exception:
        kind = ""
    big = dict(m=(256, 128, 64, 32, 16, 8), n=(512, 256, 128), k=(512, 256, 128))
    med = dict(m=(256, 128, 64, 32, 16, 8), n=(256, 128), k=(256, 128))
    v7x = dict(m=(128, 64, 32, 16, 8), n=(256, 128), k=(256, 128))
    if "v6" in kind:
        return big, 100 * 1024 * 1024        # 128 MiB physical VMEM
    if "v5" in kind:
        return med, 64 * 1024 * 1024         # v5e: 4x128 MXU, keep tiles modest
    if "7" in kind:
        return v7x, 48 * 1024 * 1024         # v7x: only 64 MiB physical VMEM
    return med, None                          # unknown: keep compiler default


_TILES, _VMEM_LIMIT = _select_tiles_and_vmem()


def _cparams(dims):
    kw = dict(dimension_semantics=dims)
    if _VMEM_LIMIT is not None:
        kw["vmem_limit_bytes"] = _VMEM_LIMIT
    return pltpu.CompilerParams(**kw)


def _pick_tile(dim, candidates):
    """Largest candidate evenly dividing `dim`; small dims pass through whole."""
    for c in candidates:
        if dim >= c and dim % c == 0:
            return c
    if dim <= candidates[0]:
        return dim
    raise ValueError(
        f"No legal tile for dim={dim} among {candidates}; pad the dimension "
        "to a multiple of a supported tile size.")


# ---------------------------------------------------------------------------
# Pallas kernels
# ---------------------------------------------------------------------------

def _rms_scale_kernel(x_ref, o_ref, *, eps):
    """Per-row inverse RMS: o = rsqrt(mean(x^2, axis=-1) + eps).  (M,1) f32."""
    x = x_ref[...].astype(jnp.float32)
    o_ref[...] = jax.lax.rsqrt(jnp.mean(x * x, axis=-1, keepdims=True) + eps)


def _scaled_matmul_kernel(x_ref, g_ref, s_ref, w_ref, o_ref, acc_ref):
    """K-tiled matmul with the RMSNorm scale applied per tile:
       o = ((x * g * s) @ W), K is grid axis 2, f32 accumulator."""
    k = pl.program_id(2)

    @pl.when(k == 0)
    def _():
        acc_ref[...] = jnp.zeros_like(acc_ref)

    xn = (x_ref[...].astype(jnp.float32)
          * g_ref[...].astype(jnp.float32)
          * s_ref[...]).astype(jnp.bfloat16)
    acc_ref[...] += jnp.dot(xn, w_ref[...], preferred_element_type=jnp.float32)

    @pl.when(k == pl.num_programs(2) - 1)
    def _():
        o_ref[...] = acc_ref[...].astype(o_ref.dtype)


def _matmul_res_kernel(x_ref, w_ref, r_ref, o_ref, acc_ref):
    """Tiled matmul with fused residual add: o = x @ W + r (K = grid axis 2)."""
    k = pl.program_id(2)

    @pl.when(k == 0)
    def _():
        acc_ref[...] = jnp.zeros_like(acc_ref)

    acc_ref[...] += jnp.dot(x_ref[...], w_ref[...],
                            preferred_element_type=jnp.float32)

    @pl.when(k == pl.num_programs(2) - 1)
    def _():
        o_ref[...] = (acc_ref[...] + r_ref[...].astype(jnp.float32)
                      ).astype(o_ref.dtype)


def _ffn_kernel(x_ref, g_ref, w1_ref, w3_ref, w2_ref, o_ref, xn_ref, acc_ref,
                *, eps):
    """Fused RMSNorm + gated-SiLU FFN + residual, tiled over the hidden dim.

    out = x + W2( silu(rmsnorm(x) W1) * (rmsnorm(x) W3) )
    The normalized activations are computed once per M tile (k == 0) into a
    bf16 VMEM scratch and reused for every hidden-dim tile.
    """
    k = pl.program_id(1)

    @pl.when(k == 0)
    def _():
        x = x_ref[...].astype(jnp.float32)
        ms = jnp.mean(x * x, axis=-1, keepdims=True)
        xn_ref[...] = (x * jax.lax.rsqrt(ms + eps)
                       * g_ref[...].astype(jnp.float32)).astype(jnp.bfloat16)
        acc_ref[...] = jnp.zeros_like(acc_ref)

    xn = xn_ref[...]
    gate = jnp.dot(xn, w1_ref[...], preferred_element_type=jnp.float32)
    up = jnp.dot(xn, w3_ref[...], preferred_element_type=jnp.float32)
    h = (gate * jax.nn.sigmoid(gate)) * up
    acc_ref[...] += jnp.dot(h.astype(jnp.bfloat16), w2_ref[...],
                            preferred_element_type=jnp.float32)

    @pl.when(k == pl.num_programs(1) - 1)
    def _():
        o_ref[...] = (x_ref[...].astype(jnp.float32)
                      + acc_ref[...]).astype(o_ref.dtype)


def _flash_attn_kernel(start_ref, q_ref, k_ref, v_ref, o_ref,
                       m_ref, l_ref, acc_ref, *, tq, tkv, n_rep):
    """Online-softmax attention, tiled over query (axis 2) and KV (axis 3).

    One kernel invocation handles all n_rep query heads of a GQA group, so
    each K/V tile is streamed from HBM once per group.  The causal mask
    (which also hides cache slots beyond start_pos + S) is generated in-kernel
    from iota + start_pos; fully-masked KV tiles are skipped.
    """
    qi = pl.program_id(2)
    ti = pl.program_id(3)
    start = start_ref[0]
    hd = q_ref.shape[-1]

    @pl.when(ti == 0)
    def _():
        m_ref[...] = jnp.full_like(m_ref, NEG_INF)
        l_ref[...] = jnp.zeros_like(l_ref)
        acc_ref[...] = jnp.zeros_like(acc_ref)

    # Skip KV tiles that lie entirely in the future of every query row here.
    @pl.when(ti * tkv <= start + (qi + 1) * tq - 1)
    def _():
        q = q_ref[...].reshape(n_rep, tq, hd)                 # bf16
        k = jnp.broadcast_to(k_ref[...].reshape(tkv, hd), (n_rep, tkv, hd))
        v = jnp.broadcast_to(v_ref[...].reshape(tkv, hd), (n_rep, tkv, hd))

        # 1/sqrt(hd) was already folded into q during RoPE.
        s = jnp.einsum("rqd,rkd->rqk", q, k,
                       preferred_element_type=jnp.float32)    # (n_rep, tq, tkv)

        q_pos = (start + qi * tq
                 + jax.lax.broadcasted_iota(jnp.int32, (n_rep, tq, tkv), 1))
        kv_pos = (ti * tkv
                  + jax.lax.broadcasted_iota(jnp.int32, (n_rep, tq, tkv), 2))
        valid = kv_pos <= q_pos
        s = jnp.where(valid, s, NEG_INF)

        m_prev = m_ref[...]
        m_new = jnp.maximum(m_prev, jnp.max(s, axis=-1, keepdims=True))
        alpha = jnp.exp(m_prev - m_new)
        p = jnp.where(valid, jnp.exp(s - m_new), 0.0)
        l_ref[...] = alpha * l_ref[...] + jnp.sum(p, axis=-1, keepdims=True)
        acc_ref[...] = alpha * acc_ref[...] + jnp.einsum(
            "rqk,rkd->rqd", p.astype(jnp.bfloat16), v,
            preferred_element_type=jnp.float32)
        m_ref[...] = m_new

    @pl.when(ti == pl.num_programs(3) - 1)
    def _():
        out = acc_ref[...] / l_ref[...]
        o_ref[...] = out.reshape(1, n_rep, tq, hd).astype(o_ref.dtype)


# ---------------------------------------------------------------------------
# Pallas wrappers
# ---------------------------------------------------------------------------

def pallas_rms_scale(x, eps):
    """Per-row rsqrt(mean(x^2) + eps) prepass (done once, reused by matmuls)."""
    M, D = x.shape
    tm = _pick_tile(M, _TILES["m"])
    return pl.pallas_call(
        functools.partial(_rms_scale_kernel, eps=eps),
        out_shape=jax.ShapeDtypeStruct((M, 1), jnp.float32),
        grid=(M // tm,),
        in_specs=[pl.BlockSpec((tm, D), lambda i: (i, 0))],
        out_specs=pl.BlockSpec((tm, 1), lambda i: (i, 0)),
        compiler_params=_cparams(("parallel",)),
    )(x)


def pallas_scaled_matmul(x, g, rstd, w_t, out_dtype):
    """o = (x * g * rstd) @ w_t, i.e. RMSNorm fused into a K-tiled matmul."""
    M, D = x.shape
    N = w_t.shape[1]
    tm = _pick_tile(M, _TILES["m"])
    tn = _pick_tile(N, _TILES["n"])
    tk = _pick_tile(D, _TILES["k"])
    return pl.pallas_call(
        _scaled_matmul_kernel,
        out_shape=jax.ShapeDtypeStruct((M, N), out_dtype),
        grid=(M // tm, N // tn, D // tk),
        in_specs=[pl.BlockSpec((tm, tk), lambda i, j, k: (i, k)),
                  pl.BlockSpec((1, tk), lambda i, j, k: (0, k)),
                  pl.BlockSpec((tm, 1), lambda i, j, k: (i, 0)),
                  pl.BlockSpec((tk, tn), lambda i, j, k: (k, j))],
        out_specs=pl.BlockSpec((tm, tn), lambda i, j, k: (i, j)),
        scratch_shapes=[pltpu.VMEM((tm, tn), jnp.float32)],
        compiler_params=_cparams(("parallel", "parallel", "arbitrary")),
    )(x, g.reshape(1, D), rstd, w_t)


def pallas_matmul_residual(x, w_t, res, out_dtype):
    """o = x @ w_t + res, tiled over (M, N, K) with an f32 accumulator."""
    M, K = x.shape
    N = w_t.shape[1]
    tm = _pick_tile(M, _TILES["m"])
    tn = _pick_tile(N, _TILES["n"])
    tk = _pick_tile(K, _TILES["k"])
    return pl.pallas_call(
        _matmul_res_kernel,
        out_shape=jax.ShapeDtypeStruct((M, N), out_dtype),
        grid=(M // tm, N // tn, K // tk),
        in_specs=[pl.BlockSpec((tm, tk), lambda i, j, k: (i, k)),
                  pl.BlockSpec((tk, tn), lambda i, j, k: (k, j)),
                  pl.BlockSpec((tm, tn), lambda i, j, k: (i, j))],
        out_specs=pl.BlockSpec((tm, tn), lambda i, j, k: (i, j)),
        scratch_shapes=[pltpu.VMEM((tm, tn), jnp.float32)],
        compiler_params=_cparams(("parallel", "parallel", "arbitrary")),
    )(x, w_t, res)


def pallas_ffn(x, g, w1_t, w3_t, w2_t, eps):
    """out = x + W2(silu(rmsnorm(x) W1) * (rmsnorm(x) W3)), tiled over hidden."""
    M, D = x.shape
    H = w1_t.shape[1]
    tm = _pick_tile(M, _TILES["m"])
    th = _pick_tile(H, _TILES["k"])
    return pl.pallas_call(
        functools.partial(_ffn_kernel, eps=eps),
        out_shape=jax.ShapeDtypeStruct((M, D), x.dtype),
        grid=(M // tm, H // th),
        in_specs=[pl.BlockSpec((tm, D), lambda i, k: (i, 0)),
                  pl.BlockSpec((1, D), lambda i, k: (0, 0)),
                  pl.BlockSpec((D, th), lambda i, k: (0, k)),
                  pl.BlockSpec((D, th), lambda i, k: (0, k)),
                  pl.BlockSpec((th, D), lambda i, k: (k, 0))],
        out_specs=pl.BlockSpec((tm, D), lambda i, k: (i, 0)),
        scratch_shapes=[pltpu.VMEM((tm, D), jnp.bfloat16),
                        pltpu.VMEM((tm, D), jnp.float32)],
        compiler_params=_cparams(("parallel", "arbitrary")),
    )(x, g.reshape(1, D), w1_t, w3_t, w2_t)


def pallas_attention(q, k_cache, v_cache, start_pos, S, n_rep):
    """Flash attention over the KV cache with GQA head grouping.

    q: (B, Hq, S, hd) bf16 (scale folded in); k/v caches: (Bm, Hk, Sm, hd).
    The causal mask is generated in-kernel, so nothing beyond start_pos + S
    in the cache is ever attended to (no cache slicing / transposing needed).
    """
    B, Hq, _, hd = q.shape
    Hk = k_cache.shape[1]
    Sm = k_cache.shape[2]
    T = start_pos + S

    tq = _pick_tile(S, _TILES["m"])
    tkv = _pick_tile(Sm, _TILES["n"])
    nq = S // tq
    nkv = pl.cdiv(T, tkv)          # only walk tiles that can hold visible keys

    def q_map(b, g, qi, ti, sp):
        return (b, g, qi, 0)

    def kv_map(b, g, qi, ti, sp):
        # Clamp fully-masked (future) KV tiles onto the last useful tile so the
        # pipeline reuses the resident block instead of issuing a wasted DMA.
        last = (sp[0] + (qi + 1) * tq - 1) // tkv
        return (b, g, jnp.minimum(ti, last), 0)

    grid_spec = pltpu.PrefetchScalarGridSpec(
        num_scalar_prefetch=1,
        grid=(B, Hk, nq, nkv),
        in_specs=[pl.BlockSpec((1, n_rep, tq, hd), q_map),
                  pl.BlockSpec((1, 1, tkv, hd), kv_map),
                  pl.BlockSpec((1, 1, tkv, hd), kv_map)],
        out_specs=pl.BlockSpec((1, n_rep, tq, hd), q_map),
        scratch_shapes=[pltpu.VMEM((n_rep, tq, 1), jnp.float32),
                        pltpu.VMEM((n_rep, tq, 1), jnp.float32),
                        pltpu.VMEM((n_rep, tq, hd), jnp.float32)])

    start_arr = jnp.array([start_pos], dtype=jnp.int32)
    return pl.pallas_call(
        functools.partial(_flash_attn_kernel, tq=tq, tkv=tkv, n_rep=n_rep),
        out_shape=jax.ShapeDtypeStruct(q.shape, q.dtype),
        grid_spec=grid_spec,
        compiler_params=_cparams(("parallel", "parallel", "parallel",
                                  "arbitrary")),
    )(start_arr, q, k_cache, v_cache)


# ---------------------------------------------------------------------------
# RoPE helpers (plain JAX glue)
# ---------------------------------------------------------------------------

def precompute_freqs_cis(head_dim, end, theta):
    # TODO(synk): use_scaled_rope frequency scaling not implemented (False here).
    freqs = 1.0 / (theta ** (jnp.arange(0, head_dim, 2)[: head_dim // 2]
                             .astype(jnp.float32) / head_dim))
    t = jnp.arange(end, dtype=jnp.float32)
    angles = jnp.outer(t, freqs)                     # (end, head_dim//2)
    return jnp.cos(angles), jnp.sin(angles)


def apply_rope(x, cos, sin, scale=1.0):
    # x: (B, S, H, hd); pairs are adjacent elements along hd (torch view_as_complex)
    # TODO(synk): fuse RoPE (half-rotation + pltpu.roll) into the QKV kernel to
    # save an HBM round-trip of q/k per layer.
    B, S, H, hd = x.shape
    xf = x.astype(jnp.float32).reshape(B, S, H, hd // 2, 2)
    xr, xi = xf[..., 0], xf[..., 1]
    c = cos[None, :, None, :]
    s = sin[None, :, None, :]
    out = jnp.stack([xr * c - xi * s, xr * s + xi * c], axis=-1) * scale
    return out.reshape(B, S, H, hd).astype(jnp.bfloat16)


# ---------------------------------------------------------------------------
# Parameters & KV cache
# ---------------------------------------------------------------------------

def init_params(key, cfg):
    D, Hq, Hk, hd = cfg["dim"], cfg["n_heads"], cfg["n_kv_heads"], cfg["head_dim"]
    HID, V, L = cfg["hidden_dim"], cfg["vocab_size"], cfg["n_layers"]
    Nq, Nk = Hq * hd, Hk * hd

    def normal(key, shape):
        return (0.02 * jax.random.normal(key, shape, dtype=jnp.float32)
                ).astype(jnp.bfloat16)

    keys = jax.random.split(key, 2 + 7 * L)
    params = {
        "embed": normal(keys[0], (V, D)),
        "lm_head_t": normal(keys[1], (D, V)),        # pre-transposed (in, out)
        "norm_w": jnp.ones((D,), jnp.float32),
        "layers": [],
    }
    for l in range(L):
        k = keys[2 + 7 * l: 2 + 7 * (l + 1)]
        wq = normal(k[0], (D, Nq))
        wk = normal(k[1], (D, Nk))
        wv = normal(k[2], (D, Nk))
        params["layers"].append({
            "in_ln": jnp.ones((D,), jnp.float32),
            "post_ln": jnp.ones((D,), jnp.float32),
            "wqkv_t": jnp.concatenate([wq, wk, wv], axis=1),   # (D, Nq+2*Nk)
            "wo_t": normal(k[3], (Nq, D)),
            "w1_t": normal(k[4], (D, HID)),
            "w3_t": normal(k[5], (D, HID)),
            "w2_t": normal(k[6], (HID, D)),
        })
    cos, sin = precompute_freqs_cis(hd, cfg["max_seq_len"] * 2, cfg["rope_theta"])
    params["cos"], params["sin"] = cos, sin
    return params


def init_caches(cfg):
    # Cache layout (Bmax, Hkv, Smax, hd): attention reads it directly, so no
    # per-layer transpose of the whole cache is needed at decode time.
    Bm, Sm = cfg["max_batch_size"], cfg["max_seq_len"]
    Hk, hd = cfg["n_kv_heads"], cfg["head_dim"]
    return [dict(k=jnp.zeros((Bm, Hk, Sm, hd), jnp.bfloat16),
                 v=jnp.zeros((Bm, Hk, Sm, hd), jnp.bfloat16))
            for _ in range(cfg["n_layers"])]


# ---------------------------------------------------------------------------
# Model
# ---------------------------------------------------------------------------

def block_forward(p, cache, x2d, B, S, start_pos, cos, sin, cfg):
    Hq, Hk, hd = cfg["n_heads"], cfg["n_kv_heads"], cfg["head_dim"]
    eps = cfg["norm_eps"]
    n_rep = Hq // Hk
    Nq, Nk = Hq * hd, Hk * hd

    # RMSNorm scale prepass + K-tiled QKV projection (norm applied per tile).
    rstd = pallas_rms_scale(x2d, eps)
    qkv = pallas_scaled_matmul(x2d, p["in_ln"], rstd, p["wqkv_t"], jnp.bfloat16)
    q = qkv[:, :Nq].reshape(B, S, Hq, hd)
    k = qkv[:, Nq:Nq + Nk].reshape(B, S, Hk, hd)
    v = qkv[:, Nq + Nk:].reshape(B, S, Hk, hd)

    scale = 1.0 / math.sqrt(hd)
    q = apply_rope(q, cos, sin, scale=scale)          # fold attention scale in
    k = apply_rope(k, cos, sin)

    # Write current k/v into the (Bm, Hk, Sm, hd) cache at [start_pos, +S).
    # TODO(synk): use input_output_aliases / a Pallas writeback kernel for a
    # true in-place cache update instead of XLA dynamic_update_slice.
    k_cache = jax.lax.dynamic_update_slice(
        cache["k"], jnp.transpose(k, (0, 2, 1, 3)), (0, 0, start_pos, 0))
    v_cache = jax.lax.dynamic_update_slice(
        cache["v"], jnp.transpose(v, (0, 2, 1, 3)), (0, 0, start_pos, 0))

    # Heads are already group-major (head h -> kv group h // n_rep), so a plain
    # (B, Hq, S, hd) layout lets one attention block cover a whole GQA group.
    qh = jnp.transpose(q, (0, 2, 1, 3))               # (B, Hq, S, hd)
    attn = pallas_attention(qh, k_cache, v_cache, start_pos, S, n_rep)
    attn2d = jnp.transpose(attn, (0, 2, 1, 3)).reshape(B * S, Nq)

    # Output projection with fused residual add.
    h2d = pallas_matmul_residual(attn2d, p["wo_t"], x2d, jnp.bfloat16)

    # Fused post-attention RMSNorm + gated FFN + residual add.
    out2d = pallas_ffn(h2d, p["post_ln"], p["w1_t"], p["w3_t"], p["w2_t"], eps)
    return out2d, dict(k=k_cache, v=v_cache)


def transformer_forward(params, caches, tokens, start_pos, cfg):
    B, S = tokens.shape
    D, V = cfg["dim"], cfg["vocab_size"]
    assert 0 < S <= cfg["max_seq_len"]
    assert start_pos + S <= cfg["max_seq_len"]

    # TODO(synk): embedding gather stays in XLA (no clean rectangular BlockSpec).
    h = params["embed"][tokens]                       # (B, S, D)
    cos = params["cos"][start_pos:start_pos + S]
    sin = params["sin"][start_pos:start_pos + S]

    h2d = h.reshape(B * S, D).astype(jnp.bfloat16)
    new_caches = []
    for lp, cache in zip(params["layers"], caches):
        h2d, cache = block_forward(lp, cache, h2d, B, S, start_pos, cos, sin, cfg)
        new_caches.append(cache)

    # Final RMSNorm (scale prepass) + K-tiled lm_head; f32 logits.
    rstd = pallas_rms_scale(h2d, cfg["norm_eps"])
    logits = pallas_scaled_matmul(h2d, params["norm_w"], rstd,
                                  params["lm_head_t"], jnp.float32)
    return logits.reshape(B, S, V), new_caches


# ---------------------------------------------------------------------------
# Main
# ---------------------------------------------------------------------------

if __name__ == "__main__":
    cfg = dict(
        dim=32,
        n_heads=4,
        n_kv_heads=2,
        head_dim=8,
        hidden_dim=64,
        n_layers=2,
        max_batch_size=2,
        max_seq_len=16,
        vocab_size=128,
        norm_eps=1e-5,
        rope_theta=10000.0,
        use_scaled_rope=False,
    )

    key = jax.random.PRNGKey(0)
    pkey, tkey = jax.random.split(key)
    params = init_params(pkey, cfg)
    caches = init_caches(cfg)

    B, S = 2, 8
    tokens = jax.random.randint(tkey, (B, S), 0, cfg["vocab_size"], dtype=jnp.int32)

    # Prefill (causal mask generated inside the attention kernel).
    logits, caches = transformer_forward(params, caches, tokens, 0, cfg)
    jax.block_until_ready(logits)
    assert logits.shape == (B, S, cfg["vocab_size"])
    assert logits.dtype == jnp.float32
    assert bool(jnp.all(jnp.isfinite(logits)))

    # One decode step through the KV cache (start_pos = S, seq len 1).
    next_tok = jnp.argmax(logits[:, -1, :], axis=-1).astype(jnp.int32)[:, None]
    logits1, caches = transformer_forward(params, caches, next_tok, S, cfg)
    jax.block_until_ready(logits1)
    assert logits1.shape == (B, 1, cfg["vocab_size"])
    assert bool(jnp.all(jnp.isfinite(logits1)))

    print("KERNEL_OK")
</pallas_src>

<mosaic_0001>
module attributes {stable_mosaic.version = 11 : i64} {
  func.func @_rms_scale_kernel(%arg0: i32, %arg1: memref<16x32xbf16, #tpu.memory_space<vmem>>, %arg2: memref<16x1xf32, #tpu.memory_space<vmem>>) attributes {dimension_semantics = [#tpu.dimension_semantics<parallel>], iteration_bounds = array<i64: 1>, scalar_prefetch = 0 : i64, scratch_operands = 0 : i64, tpu.core_type = #tpu.core_type<tc>, window_params = [{transform_indices = @transform_0, window_bounds = array<i64: 16, 32>}, {transform_indices = @transform_1, window_bounds = array<i64: 16, 1>}]} {
    %c0 = arith.constant 0 : index
    %c0_0 = arith.constant 0 : index
    %0 = vector.load %arg1[%c0, %c0_0] : memref<16x32xbf16, #tpu.memory_space<vmem>>, vector<16x32xbf16>
    %1 = arith.extf %0 : vector<16x32xbf16> to vector<16x32xf32>
    %2 = arith.mulf %1, %1 : vector<16x32xf32>
    %cst = arith.constant dense<0.000000e+00> : vector<16xf32>
    %3 = vector.multi_reduction <add>, %2, %cst [1] : vector<16x32xf32> to vector<16xf32>
    %4 = vector.shape_cast %3 : vector<16xf32> to vector<16x1xf32>
    %cst_1 = arith.constant 3.200000e+01 : f32
    %5 = vector.broadcast %cst_1 : f32 to vector<16x1xf32>
    %6 = arith.divf %4, %5 : vector<16x1xf32>
    %cst_2 = arith.constant 9.99999974E-6 : f32
    %7 = vector.broadcast %cst_2 : f32 to vector<16x1xf32>
    %8 = arith.addf %6, %7 : vector<16x1xf32>
    %9 = math.rsqrt %8 : vector<16x1xf32>
    %c0_3 = arith.constant 0 : index
    %c0_4 = arith.constant 0 : index
    %10 = vector.load %arg2[%c0_3, %c0_4] : memref<16x1xf32, #tpu.memory_space<vmem>>, vector<16x1xf32>
    tpu.vector_store %arg2[%c0_3, %c0_4], %9 {strides = array<i32>} : memref<16x1xf32, #tpu.memory_space<vmem>>, vector<16x1xf32>,
    return
  }
  func.func @transform_0(%arg0: i32) -> (i32, i32) {
    %c0_i32 = arith.constant 0 : i32
    %c0_i32_0 = arith.constant 0 : i32
    return %arg0, %c0_i32 : i32, i32
  }
  func.func @transform_1(%arg0: i32) -> (i32, i32) {
    %c0_i32 = arith.constant 0 : i32
    %c0_i32_0 = arith.constant 0 : i32
    return %arg0, %c0_i32 : i32, i32
  }
}

</mosaic_0001>

<llo_original>
// kernel: tpu_custom_call.1
$region0: #{tpu_custom_call.1}
  #allocation0 [shape = 'u32[]', space=smem, size = 0x4, offset = 0x4, fixed_abs, tag = 'smem constant byte address 0x4 - core index']
  #allocation1 [shape = 'u32[144,128]{1,0:T(1,128)}', space=vmem, size = 0x12000, scoped, tag = 'internal scratch']
  %s0 = inlined_call_operand.hbm [shape: bf16[16,32], index: 0, kind: input, shape index: {}]
  %s1 = inlined_call_operand.vmem [shape: f32[16,1], index: 1, kind: output, shape index: {}]
  %s2 = sld [smem:[#allocation0]]
  $region18: #{tpu_custom_call.1} parent=0
    _
  %s4 = ssub.s32 1, %s2
  %s5 = scalar_select 0, %s4, %s2
  $region1: #{tpu_custom_call.1} parent=0
    #allocation2 [shape = 'u8[4096]{0}', space=vmem, size = 0x1000, scoped, tag = 'input window, operand 0, single buffered']
    #allocation3 [shape = 's32[1]{0}', space=sflag, size = 0x4, scoped, tag = 'scoped memory for tpu_custom_call.1']
    %6 = vsyncpa [#allocation3], 0
    // Predicated region
    $region2: #{tpu_custom_call.1} parent=1 // pred_check
      _
    $region3: #{tpu_custom_call.1} parent=1 // pred_check_branch
      %8 = sbr.rel (0) target = $region5
    $region4: #{tpu_custom_call.1} parent=1 // pred_region
      %s10 = ssub.s32 128, 128
      %11 = vsyncadd [#allocation3], %s10
      %s12 = sshll.u32 [#allocation2], 4
      %s13 = int_to_ptr.vmem [resolvable:$true] %s12
      %18 = dma.hbm_to_vmem [thread:$0]  %s0, 128, %s13, [#allocation3], 64, 64, 4
    $region5: #{tpu_custom_call.1} parent=1 // pred_fallthru
      _
    // Predicated region
    $region6: #{tpu_custom_call.1} parent=1 // pred_check
      _
    $region7: #{tpu_custom_call.1} parent=1 // pred_check_branch
      %20 = sbr.rel (0) target = $region9
    $region8: #{tpu_custom_call.1} parent=1 // pred_region
      %21 = dma.done [#allocation3], 128
    $region9: #{tpu_custom_call.1} parent=1 // pred_fallthru
      _
    %v22 = vld [vmem:[#allocation2] sm:$0xf]
    %v23 = vld [vmem:[#allocation2 + $0x4] sm:$0xf]
    %v24 = vunpack.c.l.bf16 %v22
    %v25 = vunpack.c.l.bf16 %v23
    %v26 = vmul.f32 %v24, %v24
    %v27 = vmul.f32 %v25, %v25
    %vm28 = vcmask 261120
    %v29 = vsel %vm28, %v26, 0.0
    %30 = vadd.xlane.f32.xlu0 %v29
    %v31 = vpop.xlane.xlu0 %30
    %v32 = vsel %vm28, %v27, 0.0
    %33 = vadd.xlane.f32.xlu0 %v32
    %v34 = vpop.xlane.xlu0 %33
    %v35 = vrcp.pop 32.0
    %v36 = vmul.f32 %v31, %v35
    %v37 = vmul.f32 %v34, %v35
    %v38 = vadd.f32 %v36, 1e-05
    %v39 = vadd.f32 %v37, 1e-05
    %v40 = vrsqrt.pop %v38
    %v41 = vrsqrt.pop %v39
    %vm42 = vcmask 7168
    %43 = vst.msk [vmem:[%s1] sm:$0xff] %vm42, %v40
    %44 = vst.msk [vmem:[%s1 + $0x8] sm:$0xff] %vm42, %v41
    // Predicated region
    $region10: #{tpu_custom_call.1} parent=1 // pred_check
      _
    $region11: #{tpu_custom_call.1} parent=1 // pred_check_branch
      %46 = sbr.rel (0) target = $region13
    $region12: #{tpu_custom_call.1} parent=1 // pred_region
      _
    $region13: #{tpu_custom_call.1} parent=1 // pred_fallthru
      _
    // Predicated region
    $region14: #{tpu_custom_call.1} parent=1 // pred_check
      _
    $region15: #{tpu_custom_call.1} parent=1 // pred_check_branch
      %48 = sbr.rel (0) target = $region17
    $region16: #{tpu_custom_call.1} parent=1 // pred_region
      _
    $region17: #{tpu_custom_call.1} parent=1 // pred_fallthru
      _
    %49 = vsyncpa [#allocation3], 1

</llo_original>
